<compile_context>
chip_gen: v6e
topology: v6e:2x2x1
jax: 0.10.0
libtpu: 0.0.40
codegen_flags: <defaults>
</compile_context>

<pallas_src>
import jax
import jax.numpy as jnp
import numpy as np
from jax.experimental import pallas as pl
from jax.experimental.pallas import tpu as pltpu

NUM_CONVS = 4
CONV_CH = 8
KERNEL = 2
CONV_LEN = 8                          # per-branch Conv1d input length
CONV_OUT = CONV_LEN - KERNEL + 1      # 7
POOLED = CONV_OUT // 2                # 3
FLAT = CONV_CH * NUM_CONVS * POOLED   # 96
FC1_IN = 151                          # hard-coded in the PyTorch module
RES_SIZE = FC1_IN - FLAT              # 55
HIDDEN = 256
BN_EPS = 1e-5

RAW = NUM_CONVS * CONV_LEN            # 32 raw conv samples per row
IN_LANES = 128                        # merged streamed block: [raw(32)|res(55)|pad]
FEAT_PAD = 128                        # conv features padded 96 -> 128 lanes
X_PAD = FEAT_PAD + IN_LANES           # 256 = fused fc1 contraction dim
OUT_PAD = 128                         # lane-dense logits / softmax output
NEG = -1e30                           # bias for padded logit lanes -> exp()==0

# packed-bias layout: [conv(128) | fc1(256) | fc2,bn1-folded(256) | fc3,bn2-folded(128)]
B_CONV, B_FC1, B_FC2, B_FC3 = 0, FEAT_PAD, FEAT_PAD + HIDDEN, FEAT_PAD + 2 * HIDDEN
BIAS_LEN = FEAT_PAD + 2 * HIDDEN + OUT_PAD   # 768

TILE_ALIGN = 16                       # bf16 sublane-pack alignment
MAX_TILE_B = 2048                     # per-step VMEM footprint still only ~10-15 MiB
MIN_PARALLEL_B = 2 * TILE_ALIGN       # below this a single grid step is cheaper


def _cdiv(a, b):
    return -(-a // b)


def _round_up(x, m):
    return (x + m - 1) // m * m


def _choose_tile(B):
    """Balanced batch tiling: minimize pad waste; keep >=2 grid steps when the
    batch is large enough so v7x's two TensorCores both get work."""
    want_grid = max(_cdiv(B, MAX_TILE_B), 2 if B > MIN_PARALLEL_B else 1)
    tile_b = _round_up(_cdiv(B, want_grid), TILE_ALIGN)
    grid_b = _cdiv(B, tile_b)
    return tile_b, grid_b


def _convnn_kernel(in_ref, wconv_ref, wfc_ref, bias_ref, out_ref):
    inp = in_ref[...]                                                  # (TB, 128) bf16
    # Conv1d(1, 8, 2) for all 4 branches as ONE matmul: (TB,128)@(128,256).
    # Columns 0:128 = conv at even positions, 128:256 = odd positions, in the
    # PyTorch flatten order f = c*12 + k*3 + j (lanes 96:128 zero pad); the
    # res/pad rows of w_conv are zero so they contribute nothing.
    conv = jnp.dot(inp, wconv_ref[...],
                   preferred_element_type=jnp.float32)                 # (TB, 256) f32
    # relu -> MaxPool1d(2)  ==  relu(max(even, odd) + conv_bias)
    feat = jnp.maximum(
        jnp.maximum(conv[:, :FEAT_PAD], conv[:, FEAT_PAD:])
        + bias_ref[:, B_CONV:B_CONV + FEAT_PAD], 0.0)                  # (TB, 128) f32

    # Fused fc1: x = [feat | raw/res input block] -> single K=256 MXU pass
    # (one weight pass on v6e/v7x's 256-deep MXU). fc1 rows for the raw lanes
    # are zeroed in the wrapper so only the res lanes contribute.
    x = jnp.concatenate([feat.astype(jnp.bfloat16), inp], axis=1)      # (TB, 256) bf16
    h = jnp.dot(x, wfc_ref[:, 0:HIDDEN], preferred_element_type=jnp.float32)
    h = jnp.maximum(h + bias_ref[:, B_FC1:B_FC1 + HIDDEN], 0.0)        # relu
    # bn1 (eval stats) is folded into the fc2 weights/bias in the wrapper.
    # TODO(synk): F.dropout(p=0.5, training=True) has no deterministic Pallas
    # equivalent; implemented as identity (inference semantics).

    h = jnp.dot(h.astype(jnp.bfloat16), wfc_ref[:, HIDDEN:2 * HIDDEN],
                preferred_element_type=jnp.float32)
    h = jnp.maximum(h + bias_ref[:, B_FC2:B_FC2 + HIDDEN], 0.0)        # relu
    # bn2 folded into fc3; dropout = identity.

    logits = (jnp.dot(h.astype(jnp.bfloat16),
                      wfc_ref[:, 2 * HIDDEN:2 * HIDDEN + OUT_PAD],
                      preferred_element_type=jnp.float32)
              + bias_ref[:, B_FC3:B_FC3 + OUT_PAD])                    # pad lanes ~ -1e30
    m = jnp.max(logits, axis=-1, keepdims=True)                        # softmax(dim=1)
    e = jnp.exp(logits - m)
    p = e * pl.reciprocal(jnp.sum(e, axis=-1, keepdims=True), approx=True)
    out_ref[...] = p.astype(out_ref.dtype)                             # bf16 writeback


def init_params(key, output_size):
    ks = jax.random.split(key, 12)

    def rnd(k, shape, scale=0.1):
        return scale * jax.random.normal(k, shape, jnp.float32)

    return {
        # torch Conv1d weight (8, 1, 2) with the singleton in-channel squeezed
        "conv_w": [rnd(ks[i], (CONV_CH, KERNEL)) for i in range(NUM_CONVS)],
        "conv_b": [rnd(ks[4 + i], (CONV_CH,)) for i in range(NUM_CONVS)],
        # Linear weights stored transposed (in_features, out_features)
        "fc1_w": rnd(ks[8], (FC1_IN, HIDDEN)),
        "fc1_b": jnp.zeros((HIDDEN,), jnp.float32),
        "fc2_w": rnd(ks[9], (HIDDEN, HIDDEN)),
        "fc2_b": jnp.zeros((HIDDEN,), jnp.float32),
        "fc3_w": rnd(ks[10], (HIDDEN, output_size)),
        "fc3_b": jnp.zeros((output_size,), jnp.float32),
        # BatchNorm1d defaults: gamma=1, beta=0, running_mean=0, running_var=1
        "bn1": (jnp.ones((HIDDEN,), jnp.float32), jnp.zeros((HIDDEN,), jnp.float32),
                jnp.zeros((HIDDEN,), jnp.float32), jnp.ones((HIDDEN,), jnp.float32)),
        "bn2": (jnp.ones((HIDDEN,), jnp.float32), jnp.zeros((HIDDEN,), jnp.float32),
                jnp.zeros((HIDDEN,), jnp.float32), jnp.ones((HIDDEN,), jnp.float32)),
    }


def _pack_params(params):
    """One-time glue (run at make_convnn_forward, NOT per call): build the conv
    even/odd matmul weights, fold BN into fc2/fc3, pad to lane-dense shapes and
    pack everything into 3 arrays."""
    f32 = jnp.float32
    cw = jnp.stack(params["conv_w"], axis=0)      # (4, 8, 2)  [branch, ch, tap]
    cb = jnp.stack(params["conv_b"], axis=0)      # (4, 8)

    f = np.arange(FLAT)
    c = f // (NUM_CONVS * POOLED)                 # channel
    k = (f % (NUM_CONVS * POOLED)) // POOLED      # branch
    j = f % POOLED                                # pooled position
    # pooled pos j covers conv positions 2j (even) and 2j+1 (odd):
    #   even reads samples 2j, 2j+1 ; odd reads 2j+1, 2j+2 (sample s = k*8 + pos)
    # rows 32:128 (res / pad lanes of the merged input block) stay zero.
    w_even = (jnp.zeros((IN_LANES, FEAT_PAD), f32)
              .at[k * CONV_LEN + 2 * j, f].set(cw[k, c, 0])
              .at[k * CONV_LEN + 2 * j + 1, f].set(cw[k, c, 1]))
    w_odd = (jnp.zeros((IN_LANES, FEAT_PAD), f32)
             .at[k * CONV_LEN + 2 * j + 1, f].set(cw[k, c, 0])
             .at[k * CONV_LEN + 2 * j + 2, f].set(cw[k, c, 1]))
    w_conv = jnp.concatenate([w_even, w_odd], axis=1).astype(jnp.bfloat16)  # (128, 256)
    b_conv = jnp.zeros((FEAT_PAD,), f32).at[f].set(cb[k, c])

    def bn_fold(bn):
        gamma, beta, mean, var = bn
        s = gamma / jnp.sqrt(var + BN_EPS)
        return s, beta - mean * s

    s1, t1 = bn_fold(params["bn1"])
    s2, t2 = bn_fold(params["bn2"])

    # fc1 padded to the in-kernel x layout:
    #   [feat(96)+pad(32) | raw(32, zero rows) | res(55) | pad(41)]
    w1 = params["fc1_w"]
    w1_pad = (jnp.zeros((X_PAD, HIDDEN), f32)
              .at[0:FLAT].set(w1[:FLAT])
              .at[FEAT_PAD + RAW:FEAT_PAD + RAW + RES_SIZE].set(w1[FLAT:]))
    b1 = params["fc1_b"]

    # BN is affine and sits between a relu and the next Linear -> fold (eval stats).
    w2 = s1[:, None] * params["fc2_w"]
    b2 = t1 @ params["fc2_w"] + params["fc2_b"]
    w3 = s2[:, None] * params["fc3_w"]
    b3 = t2 @ params["fc3_w"] + params["fc3_b"]

    out_size = params["fc3_w"].shape[1]
    assert out_size <= OUT_PAD
    w3_pad = jnp.zeros((HIDDEN, OUT_PAD), f32).at[:, :out_size].set(w3)
    b3_pad = jnp.full((OUT_PAD,), NEG, f32).at[:out_size].set(b3)

    w_fc = jnp.concatenate([w1_pad, w2, w3_pad], axis=1).astype(jnp.bfloat16)  # (256, 640)
    biases = jnp.concatenate([b_conv, b1, b2, b3_pad]).reshape(1, BIAS_LEN).astype(f32)
    return w_conv, w_fc, biases, out_size


def make_convnn_forward(params):
    """Pack weights ONCE and return a jitted forward(conv1..conv4, res)."""
    w_conv, w_fc, biases, out_size = _pack_params(params)

    @jax.jit
    def forward(conv1, conv2, conv3, conv4, res):
        # conv*: (B, 1, CONV_LEN) NCL like PyTorch; res: (B, RES_SIZE)
        B = res.shape[0]
        tile_b, grid_b = _choose_tile(B)
        b_pad = grid_b * tile_b

        # One lane-dense streamed block per row: [raw(32) | res(55) | pad(41)], bf16.
        # (concat/pad/cast fuse with the pallas_call under this single jit.)
        inp = jnp.concatenate(
            [conv1[:, 0, :], conv2[:, 0, :], conv3[:, 0, :], conv4[:, 0, :], res],
            axis=1)                                                       # (B, 87)
        inp = jnp.pad(inp, ((0, b_pad - B),
                            (0, IN_LANES - RAW - RES_SIZE))).astype(jnp.bfloat16)

        out = pl.pallas_call(
            _convnn_kernel,
            out_shape=jax.ShapeDtypeStruct((b_pad, OUT_PAD), jnp.bfloat16),
            grid=(grid_b,),
            in_specs=[
                pl.BlockSpec((tile_b, IN_LANES), lambda i: (i, 0)),              # streamed
                pl.BlockSpec((IN_LANES, 2 * FEAT_PAD), lambda i: (0, 0)),        # resident
                pl.BlockSpec((X_PAD, 2 * HIDDEN + OUT_PAD), lambda i: (0, 0)),   # resident
                pl.BlockSpec((1, BIAS_LEN), lambda i: (0, 0)),                   # resident
            ],
            out_specs=pl.BlockSpec((tile_b, OUT_PAD), lambda i: (i, 0)),
            compiler_params=pltpu.CompilerParams(
                dimension_semantics=("parallel",),        # megacore sharding on v7x
                vmem_limit_bytes=48 * 1024 * 1024),
        )(inp, w_conv, w_fc, biases)

        return out[:B, :out_size].astype(jnp.float32)

    return forward


def ref_forward(params, conv1, conv2, conv3, conv4, res):
    """Pure-JAX f32 reference mirroring the PyTorch forward (dropout=id, BN eval)."""
    feats = []
    for x_ncl, W, bvec in zip((conv1, conv2, conv3, conv4),
                              params["conv_w"], params["conv_b"]):
        x = x_ncl[:, 0, :]                                            # (B, L)
        conv = (x[:, :-1, None] * W[None, None, :, 0]
                + x[:, 1:, None] * W[None, None, :, 1] + bvec)        # (B, 7, 8)
        conv = jnp.maximum(conv, 0.0)
        pooled = jnp.maximum(conv[:, 0:2 * POOLED:2, :],
                             conv[:, 1:2 * POOLED + 1:2, :])          # (B, 3, 8)
        feats.append(jnp.transpose(pooled, (0, 2, 1)))                # (B, 8, 3)
    x = jnp.concatenate(feats, axis=2).reshape(res.shape[0], FLAT)    # (B, 96)
    x = jnp.concatenate([x, res], axis=1)                             # (B, 151)

    def bn(h, p):
        gamma, beta, mean, var = p
        return (h - mean) / jnp.sqrt(var + BN_EPS) * gamma + beta

    h = jnp.maximum(x @ params["fc1_w"] + params["fc1_b"], 0.0)
    h = bn(h, params["bn1"])
    h = jnp.maximum(h @ params["fc2_w"] + params["fc2_b"], 0.0)
    h = bn(h, params["bn2"])
    logits = h @ params["fc3_w"] + params["fc3_b"]
    return jax.nn.softmax(logits, axis=-1)


if __name__ == "__main__":
    B = 4
    OUTPUT_SIZE = 3

    key = jax.random.PRNGKey(0)
    k_in = jax.random.split(key, 6)
    conv_in = [jax.random.normal(k_in[i], (B, 1, CONV_LEN), jnp.float32)
               for i in range(NUM_CONVS)]
    res = jax.random.normal(k_in[4], (B, RES_SIZE), jnp.float32)

    params = init_params(jax.random.PRNGKey(1), OUTPUT_SIZE)

    forward = make_convnn_forward(params)   # packs weights once
    out = forward(*conv_in, res)
    out = jax.block_until_ready(out)

    ref = ref_forward(params, *conv_in, res)
    assert out.shape == (B, OUTPUT_SIZE)
    # bf16 matmul operands / bf16 output (f32 accumulation) => relaxed tolerance.
    np.testing.assert_allclose(np.asarray(out), np.asarray(ref), atol=2e-2, rtol=2e-2)
    print("KERNEL_OK")
</pallas_src>

<mosaic_0001>
module attributes {stable_mosaic.version = 11 : i64} {
  func.func @_convnn_kernel(%arg0: i32, %arg1: memref<16x128xbf16, #tpu.memory_space<vmem>>, %arg2: memref<128x256xbf16, #tpu.memory_space<vmem>>, %arg3: memref<256x640xbf16, #tpu.memory_space<vmem>>, %arg4: memref<1x768xf32, #tpu.memory_space<vmem>>, %arg5: memref<16x128xbf16, #tpu.memory_space<vmem>>) attributes {dimension_semantics = [#tpu.dimension_semantics<parallel>], iteration_bounds = array<i64: 1>, scalar_prefetch = 0 : i64, scratch_operands = 0 : i64, tpu.core_type = #tpu.core_type<tc>, window_params = [{transform_indices = @transform_0, window_bounds = array<i64: 16, 128>}, {pipeline_mode = #tpu.pipeline_mode<synchronous>, transform_indices = @transform_1, window_bounds = array<i64: 128, 256>}, {pipeline_mode = #tpu.pipeline_mode<synchronous>, transform_indices = @transform_2, window_bounds = array<i64: 256, 640>}, {pipeline_mode = #tpu.pipeline_mode<synchronous>, transform_indices = @transform_3, window_bounds = array<i64: 1, 768>}, {transform_indices = @transform_4, window_bounds = array<i64: 16, 128>}]} {
    %c0 = arith.constant 0 : index
    %c0_0 = arith.constant 0 : index
    %0 = vector.load %arg1[%c0, %c0_0] : memref<16x128xbf16, #tpu.memory_space<vmem>>, vector<16x128xbf16>
    %c0_1 = arith.constant 0 : index
    %c0_2 = arith.constant 0 : index
    %1 = vector.load %arg2[%c0_1, %c0_2] : memref<128x256xbf16, #tpu.memory_space<vmem>>, vector<128x256xbf16>
    %cst = arith.constant dense<0.000000e+00> : vector<16x256xf32>
    %2 = tpu.matmul %0, %1, %cst {dimension_numbers = #tpu.dot_dimension_numbers<[1], [0], [0], [1], [0, 0, 1, 1], [], []>} : vector<16x128xbf16>, vector<128x256xbf16>, vector<16x256xf32> -> vector<16x256xf32>
    %3 = vector.extract_strided_slice %2 {offsets = [0, 0], sizes = [16, 128], strides = [1, 1]} : vector<16x256xf32> to vector<16x128xf32>
    %4 = vector.extract_strided_slice %2 {offsets = [0, 128], sizes = [16, 128], strides = [1, 1]} : vector<16x256xf32> to vector<16x128xf32>
    %5 = arith.maximumf %3, %4 : vector<16x128xf32>
    %c0_3 = arith.constant 0 : index
    %c0_4 = arith.constant 0 : index
    %6 = vector.load %arg4[%c0_3, %c0_4] : memref<1x768xf32, #tpu.memory_space<vmem>>, vector<1x128xf32>
    %7 = vector.broadcast %6 : vector<1x128xf32> to vector<16x128xf32>
    %8 = arith.addf %5, %7 : vector<16x128xf32>
    %cst_5 = arith.constant 0.000000e+00 : f32
    %9 = vector.broadcast %cst_5 : f32 to vector<16x128xf32>
    %10 = arith.maximumf %8, %9 : vector<16x128xf32>
    %11 = arith.truncf %10 : vector<16x128xf32> to vector<16x128xbf16>
    %12 = tpu.concatenate %11, %0 in 1 : vector<16x128xbf16>, vector<16x128xbf16> -> vector<16x256xbf16>
    %c0_6 = arith.constant 0 : index
    %c0_7 = arith.constant 0 : index
    %13 = vector.load %arg3[%c0_6, %c0_7] : memref<256x640xbf16, #tpu.memory_space<vmem>>, vector<256x256xbf16>
    %cst_8 = arith.constant dense<0.000000e+00> : vector<16x256xf32>
    %14 = tpu.matmul %12, %13, %cst_8 {dimension_numbers = #tpu.dot_dimension_numbers<[1], [0], [0], [1], [0, 0, 1, 1], [], []>} : vector<16x256xbf16>, vector<256x256xbf16>, vector<16x256xf32> -> vector<16x256xf32>
    %c0_9 = arith.constant 0 : index
    %c128 = arith.constant 128 : index
    %15 = vector.load %arg4[%c0_9, %c128] : memref<1x768xf32, #tpu.memory_space<vmem>>, vector<1x256xf32>
    %16 = vector.broadcast %15 : vector<1x256xf32> to vector<16x256xf32>
    %17 = arith.addf %14, %16 : vector<16x256xf32>
    %cst_10 = arith.constant 0.000000e+00 : f32
    %18 = vector.broadcast %cst_10 : f32 to vector<16x256xf32>
    %19 = arith.maximumf %17, %18 : vector<16x256xf32>
    %20 = arith.truncf %19 : vector<16x256xf32> to vector<16x256xbf16>
    %c0_11 = arith.constant 0 : index
    %c256 = arith.constant 256 : index
    %21 = vector.load %arg3[%c0_11, %c256] : memref<256x640xbf16, #tpu.memory_space<vmem>>, vector<256x256xbf16>
    %cst_12 = arith.constant dense<0.000000e+00> : vector<16x256xf32>
    %22 = tpu.matmul %20, %21, %cst_12 {dimension_numbers = #tpu.dot_dimension_numbers<[1], [0], [0], [1], [0, 0, 1, 1], [], []>} : vector<16x256xbf16>, vector<256x256xbf16>, vector<16x256xf32> -> vector<16x256xf32>
    %c0_13 = arith.constant 0 : index
    %c384 = arith.constant 384 : index
    %23 = vector.load %arg4[%c0_13, %c384] : memref<1x768xf32, #tpu.memory_space<vmem>>, vector<1x256xf32>
    %24 = vector.broadcast %23 : vector<1x256xf32> to vector<16x256xf32>
    %25 = arith.addf %22, %24 : vector<16x256xf32>
    %cst_14 = arith.constant 0.000000e+00 : f32
    %26 = vector.broadcast %cst_14 : f32 to vector<16x256xf32>
    %27 = arith.maximumf %25, %26 : vector<16x256xf32>
    %28 = arith.truncf %27 : vector<16x256xf32> to vector<16x256xbf16>
    %c0_15 = arith.constant 0 : index
    %c512 = arith.constant 512 : index
    %29 = vector.load %arg3[%c0_15, %c512] : memref<256x640xbf16, #tpu.memory_space<vmem>>, vector<256x128xbf16>
    %cst_16 = arith.constant dense<0.000000e+00> : vector<16x128xf32>
    %30 = tpu.matmul %28, %29, %cst_16 {dimension_numbers = #tpu.dot_dimension_numbers<[1], [0], [0], [1], [0, 0, 1, 1], [], []>} : vector<16x256xbf16>, vector<256x128xbf16>, vector<16x128xf32> -> vector<16x128xf32>
    %c0_17 = arith.constant 0 : index
    %c640 = arith.constant 640 : index
    %31 = vector.load %arg4[%c0_17, %c640] : memref<1x768xf32, #tpu.memory_space<vmem>>, vector<1x128xf32>
    %32 = vector.broadcast %31 : vector<1x128xf32> to vector<16x128xf32>
    %33 = arith.addf %30, %32 : vector<16x128xf32>
    %cst_18 = arith.constant dense<0xFF800000> : vector<16xf32>
    %34 = vector.multi_reduction <maximumf>, %33, %cst_18 [1] : vector<16x128xf32> to vector<16xf32>
    %35 = vector.shape_cast %34 : vector<16xf32> to vector<16x1xf32>
    %36 = vector.broadcast %35 : vector<16x1xf32> to vector<16x128xf32>
    %37 = arith.subf %33, %36 : vector<16x128xf32>
    %38 = math.exp %37 : vector<16x128xf32>
    %cst_19 = arith.constant dense<0.000000e+00> : vector<16xf32>
    %39 = vector.multi_reduction <add>, %38, %cst_19 [1] : vector<16x128xf32> to vector<16xf32>
    %40 = vector.shape_cast %39 : vector<16xf32> to vector<16x1xf32>
    %41 = tpu.reciprocal %40 {approx = true} : vector<16x1xf32> -> vector<16x1xf32>
    %42 = vector.broadcast %41 : vector<16x1xf32> to vector<16x128xf32>
    %43 = arith.mulf %38, %42 : vector<16x128xf32>
    %44 = arith.truncf %43 : vector<16x128xf32> to vector<16x128xbf16>
    %c0_20 = arith.constant 0 : index
    %c0_21 = arith.constant 0 : index
    %45 = vector.load %arg5[%c0_20, %c0_21] : memref<16x128xbf16, #tpu.memory_space<vmem>>, vector<16x128xbf16>
    tpu.vector_store %arg5[%c0_20, %c0_21], %44 {strides = array<i32>} : memref<16x128xbf16, #tpu.memory_space<vmem>>, vector<16x128xbf16>,
    return
  }
  func.func @transform_0(%arg0: i32) -> (i32, i32) {
    %c0_i32 = arith.constant 0 : i32
    %c0_i32_0 = arith.constant 0 : i32
    return %arg0, %c0_i32 : i32, i32
  }
  func.func @transform_1(%arg0: i32) -> (i32, i32) {
    %c0_i32 = arith.constant 0 : i32
    %c0_i32_0 = arith.constant 0 : i32
    %c0_i32_1 = arith.constant 0 : i32
    return %c0_i32, %c0_i32_0 : i32, i32
  }
  func.func @transform_2(%arg0: i32) -> (i32, i32) {
    %c0_i32 = arith.constant 0 : i32
    %c0_i32_0 = arith.constant 0 : i32
    %c0_i32_1 = arith.constant 0 : i32
    return %c0_i32, %c0_i32_0 : i32, i32
  }
  func.func @transform_3(%arg0: i32) -> (i32, i32) {
    %c0_i32 = arith.constant 0 : i32
    %c0_i32_0 = arith.constant 0 : i32
    %c0_i32_1 = arith.constant 0 : i32
    return %c0_i32, %c0_i32_0 : i32, i32
  }
  func.func @transform_4(%arg0: i32) -> (i32, i32) {
    %c0_i32 = arith.constant 0 : i32
    %c0_i32_0 = arith.constant 0 : i32
    return %arg0, %c0_i32 : i32, i32
  }
}

</mosaic_0001>

<llo_original>
// kernel: forward.1
$region0: #{forward.1}
  #allocation0 [shape = 'u32[]', space=smem, size = 0x4, offset = 0x4, fixed_abs, tag = 'smem constant byte address 0x4 - core index']
  #allocation1 [shape = 'u32[144,128]{1,0:T(1,128)}', space=vmem, size = 0x12000, scoped, tag = 'internal scratch']
  %s0 = inlined_call_operand.vmem [shape: bf16[16,128], index: 0, kind: input, shape index: {}]
  %s1 = inlined_call_operand.hbm [shape: bf16[128,256], index: 1, kind: input, shape index: {}]
  %s2 = inlined_call_operand.hbm [shape: bf16[256,640], index: 2, kind: input, shape index: {}]
  %s3 = inlined_call_operand.vmem [shape: f32[1,768], index: 3, kind: input, shape index: {}]
  %s4 = inlined_call_operand.vmem [shape: bf16[16,128], index: 4, kind: output, shape index: {}]
  %s5 = sld [smem:[#allocation0]]
  $region34: #{forward.1} parent=0
    _
  %s7 = ssub.s32 1, %s5
  %s8 = scalar_select 0, %s7, %s5
  $region1: #{forward.1} parent=0
    #allocation2 [shape = 'u8[65536]{0}', space=vmem, size = 0x10000, scoped, tag = 'input window, operand 1, single buffered']
    #allocation3 [shape = 's32[1]{0}', space=sflag, size = 0x4, scoped, tag = 'scoped memory for forward.1']
    #allocation4 [shape = 'u8[327680]{0}', space=vmem, size = 0x50000, scoped, tag = 'input window, operand 2, single buffered']
    #allocation5 [shape = 's32[1]{0}', space=sflag, size = 0x4, scoped, tag = 'scoped memory for forward.1']
    %9 = vsyncpa [#allocation3], 0
    %10 = vsyncpa [#allocation5], 0
    // Predicated region
    $region2: #{forward.1} parent=1 // pred_check
      _
    $region3: #{forward.1} parent=1 // pred_check_branch
      %12 = sbr.rel (0) target = $region5
    $region4: #{forward.1} parent=1 // pred_region
      _
    $region5: #{forward.1} parent=1 // pred_fallthru
      _
    // Predicated region
    $region6: #{forward.1} parent=1 // pred_check
      _
    $region7: #{forward.1} parent=1 // pred_check_branch
      %14 = sbr.rel (0) target = $region9
    $region8: #{forward.1} parent=1 // pred_region
      %s16 = ssub.s32 2048, 2048
      %17 = vsyncadd [#allocation3], %s16
      %s18 = sshll.u32 [#allocation2], 4
      %s19 = int_to_ptr.vmem [resolvable:$true] %s18
      %24 = dma.hbm_to_vmem [thread:$0]  %s1, 2048, %s19, [#allocation3], 128, 128, 8
    $region9: #{forward.1} parent=1 // pred_fallthru
      _
    // Predicated region
    $region10: #{forward.1} parent=1 // pred_check
      _
    $region11: #{forward.1} parent=1 // pred_check_branch
      %26 = sbr.rel (0) target = $region13
    $region12: #{forward.1} parent=1 // pred_region
      %s28 = ssub.s32 10240, 10240
      %29 = vsyncadd [#allocation5], %s28
      %s30 = sshll.u32 [#allocation4], 4
      %s31 = int_to_ptr.vmem [resolvable:$true] %s30
      %36 = dma.hbm_to_vmem [thread:$0]  %s2, 10240, %s31, [#allocation5], 320, 320, 20
    $region13: #{forward.1} parent=1 // pred_fallthru
      _
    // Predicated region
    $region14: #{forward.1} parent=1 // pred_check
      _
    $region15: #{forward.1} parent=1 // pred_check_branch
      %38 = sbr.rel (0) target = $region17
    $region16: #{forward.1} parent=1 // pred_region
      _
    $region17: #{forward.1} parent=1 // pred_fallthru
      _
    // Predicated region
    $region18: #{forward.1} parent=1 // pred_check
      _
    $region19: #{forward.1} parent=1 // pred_check_branch
      %40 = sbr.rel (0) target = $region21
    $region20: #{forward.1} parent=1 // pred_region
      %41 = dma.done [#allocation3], 2048
    $region21: #{forward.1} parent=1 // pred_fallthru
      _
    // Predicated region
    $region22: #{forward.1} parent=1 // pred_check
      _
    $region23: #{forward.1} parent=1 // pred_check_branch
      %43 = sbr.rel (0) target = $region25
    $region24: #{forward.1} parent=1 // pred_region
      %44 = dma.done [#allocation5], 10240
    $region25: #{forward.1} parent=1 // pred_fallthru
      _
    %v46 = vld [vmem:[%s0] sm:$0xf]
    %v47 = vld [vmem:[%s0 + $0x4] sm:$0xf]
    %v48 = vld [vmem:[#allocation2] sm:$0xff]
    %v49 = vld [vmem:[#allocation2 + $0x8] sm:$0xff]
    %v50 = vld [vmem:[#allocation2 + $0x10] sm:$0xff]
    %v51 = vld [vmem:[#allocation2 + $0x18] sm:$0xff]
    %v52 = vld [vmem:[#allocation2 + $0x20] sm:$0xff]
    %v53 = vld [vmem:[#allocation2 + $0x28] sm:$0xff]
    %v54 = vld [vmem:[#allocation2 + $0x30] sm:$0xff]
    %v55 = vld [vmem:[#allocation2 + $0x38] sm:$0xff]
    %v56 = vld [vmem:[#allocation2 + $0x40] sm:$0xff]
    %v57 = vld [vmem:[#allocation2 + $0x48] sm:$0xff]
    %v58 = vld [vmem:[#allocation2 + $0x50] sm:$0xff]
    %v59 = vld [vmem:[#allocation2 + $0x58] sm:$0xff]
    %v60 = vld [vmem:[#allocation2 + $0x60] sm:$0xff]
    %v61 = vld [vmem:[#allocation2 + $0x68] sm:$0xff]
    %v62 = vld [vmem:[#allocation2 + $0x70] sm:$0xff]
    %v63 = vld [vmem:[#allocation2 + $0x78] sm:$0xff]
    %v66 = vunpack.c.l.b16 %v46
    %v67 = vunpack.c.l.b16 %v47
    %v68 = vpack.c.b16 %v67, %v66
    %v86 = vunpack.c.l.b16 %v48
    %v87 = vunpack.c.h.b16 %v48
    %v88 = vunpack.c.l.b16 %v49
    %v89 = vunpack.c.h.b16 %v49
    %v90 = vunpack.c.l.b16 %v50
    %v91 = vunpack.c.h.b16 %v50
    %v92 = vunpack.c.l.b16 %v51
    %v93 = vunpack.c.h.b16 %v51
    %v94 = vunpack.c.l.b16 %v52
    %v95 = vunpack.c.h.b16 %v52
    %v96 = vunpack.c.l.b16 %v53
    %v97 = vunpack.c.h.b16 %v53
    %v98 = vunpack.c.l.b16 %v54
    %v99 = vunpack.c.h.b16 %v54
    %v100 = vunpack.c.l.b16 %v55
    %v101 = vunpack.c.h.b16 %v55
    %v102 = vunpack.c.l.b16 %v56
    %v103 = vunpack.c.h.b16 %v56
    %v104 = vunpack.c.l.b16 %v57
    %v105 = vunpack.c.h.b16 %v57
    %v106 = vunpack.c.l.b16 %v58
    %v107 = vunpack.c.h.b16 %v58
    %v108 = vunpack.c.l.b16 %v59
    %v109 = vunpack.c.h.b16 %v59
    %v110 = vunpack.c.l.b16 %v60
    %v111 = vunpack.c.h.b16 %v60
    %v112 = vunpack.c.l.b16 %v61
    %v113 = vunpack.c.h.b16 %v61
    %v114 = vunpack.c.l.b16 %v62
    %v115 = vunpack.c.h.b16 %v62
    %v116 = vunpack.c.l.b16 %v63
    %v117 = vunpack.c.h.b16 %v63
    %v118 = vpack.c.b16 %v88, %v86
    %v119 = vpack.c.b16 %v89, %v87
    %v120 = vpack.c.b16 %v92, %v90
    %v121 = vpack.c.b16 %v93, %v91
    %v122 = vpack.c.b16 %v96, %v94
    %v123 = vpack.c.b16 %v97, %v95
    %v124 = vpack.c.b16 %v100, %v98
    %v125 = vpack.c.b16 %v101, %v99
    %v126 = vpack.c.b16 %v104, %v102
    %v127 = vpack.c.b16 %v105, %v103
    %v128 = vpack.c.b16 %v108, %v106
    %v129 = vpack.c.b16 %v109, %v107
    %v130 = vpack.c.b16 %v112, %v110
    %v131 = vpack.c.b16 %v113, %v111
    %v132 = vpack.c.b16 %v116, %v114
    %v133 = vpack.c.b16 %v117, %v115
    %150 = vmatprep.subr.bf16.mxu0 %v133
    %151 = vmatpush1.bf16.msra.mxu0 %v132
    %152 = vmatprep.subr.bf16.mxu0 %v131
    %153 = vmatpush1.bf16.msra.mxu0 %v130
    %154 = vmatprep.subr.bf16.mxu0 %v129
    %155 = vmatpush1.bf16.msra.mxu0 %v128
    %156 = vmatprep.subr.bf16.mxu0 %v127
    %157 = vmatpush1.bf16.msra.mxu0 %v126
    %158 = vmatprep.subr.bf16.mxu0 %v125
    %159 = vmatpush1.bf16.msra.mxu0 %v124
    %160 = vmatprep.subr.bf16.mxu0 %v123
    %161 = vmatpush1.bf16.msra.mxu0 %v122
    %162 = vmatprep.subr.bf16.mxu0 %v121
    %163 = vmatpush1.bf16.msra.mxu0 %v120
    %164 = vmatprep.subr.bf16.mxu0 %v119
    %165 = vmatpush1.bf16.msra.mxu0 %v118
    %166 = vmatprep.subr.bf16.mxu0 0
    %167 = vmatpush2.bf16.msra.mxu0 0
    %168 = vmatprep.subr.bf16.mxu0 0
    %169 = vmatpush2.bf16.msra.mxu0 0
    %170 = vmatprep.subr.bf16.mxu0 0
    %171 = vmatpush2.bf16.msra.mxu0 0
    %172 = vmatprep.subr.bf16.mxu0 0
    %173 = vmatpush2.bf16.msra.mxu0 0
    %174 = vmatprep.subr.bf16.mxu0 0
    %175 = vmatpush2.bf16.msra.mxu0 0
    %176 = vmatprep.subr.bf16.mxu0 0
    %177 = vmatpush2.bf16.msra.mxu0 0
    %178 = vmatprep.subr.bf16.mxu0 0
    %179 = vmatpush2.bf16.msra.mxu0 0
    %180 = vmatprep.subr.bf16.mxu0 0
    %181 = vmatpush2.bf16.msra.mxu0 0
    %182 = vmatprep.mubr.bf16.mxu0 0
    %183 = vmatmul.mubr.bf16.gmra.mxu0 %v68
    %v184 = vpop.f32.mrf.mxu0
    %v185 = vadd.f32 0.0, %v184
    %v186 = vpop.f32.mrf.mxu0
    %v187 = vadd.f32 0.0, %v186
    %v188 = vpop.f32.mrf.mxu0
    %v189 = vadd.f32 0.0, %v188
    %v190 = vpop.f32.mrf.mxu0
    %v191 = vadd.f32 0.0, %v190
    %192 = vdwg.mxu0
    %v193 = vmax.f32 %v185, %v187
    %v194 = vmax.f32 %v189, %v191
    %v195 = vld [vmem:[%s3] sm:$0x1]
    %v197 = vlaneseq
    %v198 = vshrl.u32 %v197, 7
    %v199 = vsub.s32 0, %v198
    %v200 = vrot.slane %v195, %v199
    %v202 = vadd.f32 %v193, %v200
    %v203 = vadd.f32 %v194, %v200
    %v204 = vmax.f32 %v202, 0.0
    %v205 = vmax.f32 %v203, 0.0
    %v206 = vpack.c.bf16 %v205, %v204
    %v207 = vld [vmem:[#allocation4] sm:$0xff]
    %v208 = vld [vmem:[#allocation4 + $0x14] sm:$0xff]
    %v209 = vld [vmem:[#allocation4 + $0x28] sm:$0xff]
    %v210 = vld [vmem:[#allocation4 + $0x3c] sm:$0xff]
    %v211 = vld [vmem:[#allocation4 + $0x50] sm:$0xff]
    %v212 = vld [vmem:[#allocation4 + $0x64] sm:$0xff]
    %v213 = vld [vmem:[#allocation4 + $0x78] sm:$0xff]
    %v214 = vld [vmem:[#allocation4 + $0x8c] sm:$0xff]
    %v215 = vld [vmem:[#allocation4 + $0xa0] sm:$0xff]
    %v216 = vld [vmem:[#allocation4 + $0xb4] sm:$0xff]
    %v217 = vld [vmem:[#allocation4 + $0xc8] sm:$0xff]
    %v218 = vld [vmem:[#allocation4 + $0xdc] sm:$0xff]
    %v219 = vld [vmem:[#allocation4 + $0xf0] sm:$0xff]
    %v220 = vld [vmem:[#allocation4 + $0x104] sm:$0xff]
    %v221 = vld [vmem:[#allocation4 + $0x118] sm:$0xff]
    %v222 = vld [vmem:[#allocation4 + $0x12c] sm:$0xff]
    %v223 = vld [vmem:[#allocation4 + $0x140] sm:$0xff]
    %v224 = vld [vmem:[#allocation4 + $0x154] sm:$0xff]
    %v225 = vld [vmem:[#allocation4 + $0x168] sm:$0xff]
    %v226 = vld [vmem:[#allocation4 + $0x17c] sm:$0xff]
    %v227 = vld [vmem:[#allocation4 + $0x190] sm:$0xff]
    %v228 = vld [vmem:[#allocation4 + $0x1a4] sm:$0xff]
    %v229 = vld [vmem:[#allocation4 + $0x1b8] sm:$0xff]
    %v230 = vld [vmem:[#allocation4 + $0x1cc] sm:$0xff]
    %v231 = vld [vmem:[#allocation4 + $0x1e0] sm:$0xff]
    %v232 = vld [vmem:[#allocation4 + $0x1f4] sm:$0xff]
    %v233 = vld [vmem:[#allocation4 + $0x208] sm:$0xff]
    %v234 = vld [vmem:[#allocation4 + $0x21c] sm:$0xff]
    %v235 = vld [vmem:[#allocation4 + $0x230] sm:$0xff]
    %v236 = vld [vmem:[#allocation4 + $0x244] sm:$0xff]
    %v237 = vld [vmem:[#allocation4 + $0x258] sm:$0xff]
    %v238 = vld [vmem:[#allocation4 + $0x26c] sm:$0xff]
    %v239 = vld [vmem:[%s3 + $0x1] sm:$0x3]
    %v241 = vlaneseq
    %v242 = vshrl.u32 %v241, 7
    %v243 = vsub.s32 0, %v242
    %v244 = vrot.slane %v239, %v243
    %v245 = vlaneseq
    %v246 = vshrl.u32 %v245, 7
    %v247 = vsub.s32 1, %v246
    %v248 = vrot.slane %v239, %v247
    %v283 = vunpack.c.l.b16 %v207
    %v284 = vunpack.c.h.b16 %v207
    %v285 = vunpack.c.l.b16 %v208
    %v286 = vunpack.c.h.b16 %v208
    %v287 = vunpack.c.l.b16 %v209
    %v288 = vunpack.c.h.b16 %v209
    %v289 = vunpack.c.l.b16 %v210
    %v290 = vunpack.c.h.b16 %v210
    %v291 = vunpack.c.l.b16 %v211
    %v292 = vunpack.c.h.b16 %v211
    %v293 = vunpack.c.l.b16 %v212
    %v294 = vunpack.c.h.b16 %v212
    %v295 = vunpack.c.l.b16 %v213
    %v296 = vunpack.c.h.b16 %v213
    %v297 = vunpack.c.l.b16 %v214
    %v298 = vunpack.c.h.b16 %v214
    %v299 = vunpack.c.l.b16 %v215
    %v300 = vunpack.c.h.b16 %v215
    %v301 = vunpack.c.l.b16 %v216
    %v302 = vunpack.c.h.b16 %v216
    %v303 = vunpack.c.l.b16 %v217
    %v304 = vunpack.c.h.b16 %v217
    %v305 = vunpack.c.l.b16 %v218
    %v306 = vunpack.c.h.b16 %v218
    %v307 = vunpack.c.l.b16 %v219
    %v308 = vunpack.c.h.b16 %v219
    %v309 = vunpack.c.l.b16 %v220
    %v310 = vunpack.c.h.b16 %v220
    %v311 = vunpack.c.l.b16 %v221
    %v312 = vunpack.c.h.b16 %v221
    %v313 = vunpack.c.l.b16 %v222
    %v314 = vunpack.c.h.b16 %v222
    %v315 = vunpack.c.l.b16 %v223
    %v316 = vunpack.c.h.b16 %v223
    %v317 = vunpack.c.l.b16 %v224
    %v318 = vunpack.c.h.b16 %v224
    %v319 = vunpack.c.l.b16 %v225
    %v320 = vunpack.c.h.b16 %v225
    %v321 = vunpack.c.l.b16 %v226
    %v322 = vunpack.c.h.b16 %v226
    %v323 = vunpack.c.l.b16 %v227
    %v324 = vunpack.c.h.b16 %v227
    %v325 = vunpack.c.l.b16 %v228
    %v326 = vunpack.c.h.b16 %v228
    %v327 = vunpack.c.l.b16 %v229
    %v328 = vunpack.c.h.b16 %v229
    %v329 = vunpack.c.l.b16 %v230
    %v330 = vunpack.c.h.b16 %v230
    %v331 = vunpack.c.l.b16 %v231
    %v332 = vunpack.c.h.b16 %v231
    %v333 = vunpack.c.l.b16 %v232
    %v334 = vunpack.c.h.b16 %v232
    %v335 = vunpack.c.l.b16 %v233
    %v336 = vunpack.c.h.b16 %v233
    %v337 = vunpack.c.l.b16 %v234
    %v338 = vunpack.c.h.b16 %v234
    %v339 = vunpack.c.l.b16 %v235
    %v340 = vunpack.c.h.b16 %v235
    %v341 = vunpack.c.l.b16 %v236
    %v342 = vunpack.c.h.b16 %v236
    %v343 = vunpack.c.l.b16 %v237
    %v344 = vunpack.c.h.b16 %v237
    %v345 = vunpack.c.l.b16 %v238
    %v346 = vunpack.c.h.b16 %v238
    %v347 = vpack.c.b16 %v285, %v283
    %v348 = vpack.c.b16 %v286, %v284
    %v349 = vpack.c.b16 %v289, %v287
    %v350 = vpack.c.b16 %v290, %v288
    %v351 = vpack.c.b16 %v293, %v291
    %v352 = vpack.c.b16 %v294, %v292
    %v353 = vpack.c.b16 %v297, %v295
    %v354 = vpack.c.b16 %v298, %v296
    %v355 = vpack.c.b16 %v301, %v299
    %v356 = vpack.c.b16 %v302, %v300
    %v357 = vpack.c.b16 %v305, %v303
    %v358 = vpack.c.b16 %v306, %v304
    %v359 = vpack.c.b16 %v309, %v307
    %v360 = vpack.c.b16 %v310, %v308
    %v361 = vpack.c.b16 %v313, %v311
    %v362 = vpack.c.b16 %v314, %v312
    %v363 = vpack.c.b16 %v317, %v315
    %v364 = vpack.c.b16 %v318, %v316
    %v365 = vpack.c.b16 %v321, %v319
    %v366 = vpack.c.b16 %v322, %v320
    %v367 = vpack.c.b16 %v325, %v323
    %v368 = vpack.c.b16 %v326, %v324
    %v369 = vpack.c.b16 %v329, %v327
    %v370 = vpack.c.b16 %v330, %v328
    %v371 = vpack.c.b16 %v333, %v331
    %v372 = vpack.c.b16 %v334, %v332
    %v373 = vpack.c.b16 %v337, %v335
    %v374 = vpack.c.b16 %v338, %v336
    %v375 = vpack.c.b16 %v341, %v339
    %v376 = vpack.c.b16 %v342, %v340
    %v377 = vpack.c.b16 %v345, %v343
    %v378 = vpack.c.b16 %v346, %v344
    %411 = vmatprep.subr.bf16.mxu0 %v362
    %412 = vmatpush1.bf16.msra.mxu0 %v361
    %413 = vmatprep.subr.bf16.mxu0 %v360
    %414 = vmatpush1.bf16.msra.mxu0 %v359
    %415 = vmatprep.subr.bf16.mxu0 %v358
    %416 = vmatpush1.bf16.msra.mxu0 %v357
    %417 = vmatprep.subr.bf16.mxu0 %v356
    %418 = vmatpush1.bf16.msra.mxu0 %v355
    %419 = vmatprep.subr.bf16.mxu0 %v354
    %420 = vmatpush1.bf16.msra.mxu0 %v353
    %421 = vmatprep.subr.bf16.mxu0 %v352
    %422 = vmatpush1.bf16.msra.mxu0 %v351
    %423 = vmatprep.subr.bf16.mxu0 %v350
    %424 = vmatpush1.bf16.msra.mxu0 %v349
    %425 = vmatprep.subr.bf16.mxu0 %v348
    %426 = vmatpush1.bf16.msra.mxu0 %v347
    %427 = vmatprep.subr.bf16.mxu0 %v378
    %428 = vmatpush2.bf16.msra.mxu0 %v377
    %429 = vmatprep.subr.bf16.mxu0 %v376
    %430 = vmatpush2.bf16.msra.mxu0 %v375
    %431 = vmatprep.subr.bf16.mxu0 %v374
    %432 = vmatpush2.bf16.msra.mxu0 %v373
    %433 = vmatprep.subr.bf16.mxu0 %v372
    %434 = vmatpush2.bf16.msra.mxu0 %v371
    %435 = vmatprep.subr.bf16.mxu0 %v370
    %436 = vmatpush2.bf16.msra.mxu0 %v369
    %437 = vmatprep.subr.bf16.mxu0 %v368
    %438 = vmatpush2.bf16.msra.mxu0 %v367
    %439 = vmatprep.subr.bf16.mxu0 %v366
    %440 = vmatpush2.bf16.msra.mxu0 %v365
    %441 = vmatprep.subr.bf16.mxu0 %v364
    %442 = vmatpush2.bf16.msra.mxu0 %v363
    %443 = vmatprep.mubr.bf16.mxu0 %v68
    %444 = vmatmul.mubr.bf16.gmra.mxu0 %v206
    %v445 = vpop.f32.mrf.mxu0
    %v446 = vadd.f32 %v244, %v445
    %v447 = vpop.f32.mrf.mxu0
    %v448 = vadd.f32 %v248, %v447
    %v449 = vpop.f32.mrf.mxu0
    %v450 = vadd.f32 %v244, %v449
    %v451 = vpop.f32.mrf.mxu0
    %v452 = vadd.f32 %v248, %v451
    %453 = vdwg.mxu0
    %v454 = vmax.f32 %v446, 0.0
    %v455 = vmax.f32 %v448, 0.0
    %v456 = vmax.f32 %v450, 0.0
    %v457 = vmax.f32 %v452, 0.0
    %v458 = vpack.c.bf16 %v456, %v454
    %v459 = vpack.c.bf16 %v457, %v455
    %v460 = vld [vmem:[#allocation4 + $0x8] sm:$0xff]
    %v461 = vld [vmem:[#allocation4 + $0x1c] sm:$0xff]
    %v462 = vld [vmem:[#allocation4 + $0x30] sm:$0xff]
    %v463 = vld [vmem:[#allocation4 + $0x44] sm:$0xff]
    %v464 = vld [vmem:[#allocation4 + $0x58] sm:$0xff]
    %v465 = vld [vmem:[#allocation4 + $0x6c] sm:$0xff]
    %v466 = vld [vmem:[#allocation4 + $0x80] sm:$0xff]
    %v467 = vld [vmem:[#allocation4 + $0x94] sm:$0xff]
    %v468 = vld [vmem:[#allocation4 + $0xa8] sm:$0xff]
    %v469 = vld [vmem:[#allocation4 + $0xbc] sm:$0xff]
    %v470 = vld [vmem:[#allocation4 + $0xd0] sm:$0xff]
    %v471 = vld [vmem:[#allocation4 + $0xe4] sm:$0xff]
    %v472 = vld [vmem:[#allocation4 + $0xf8] sm:$0xff]
    %v473 = vld [vmem:[#allocation4 + $0x10c] sm:$0xff]
    %v474 = vld [vmem:[#allocation4 + $0x120] sm:$0xff]
    %v475 = vld [vmem:[#allocation4 + $0x134] sm:$0xff]
    %v476 = vld [vmem:[#allocation4 + $0x148] sm:$0xff]
    %v477 = vld [vmem:[#allocation4 + $0x15c] sm:$0xff]
    %v478 = vld [vmem:[#allocation4 + $0x170] sm:$0xff]
    %v479 = vld [vmem:[#allocation4 + $0x184] sm:$0xff]
    %v480 = vld [vmem:[#allocation4 + $0x198] sm:$0xff]
    %v481 = vld [vmem:[#allocation4 + $0x1ac] sm:$0xff]
    %v482 = vld [vmem:[#allocation4 + $0x1c0] sm:$0xff]
    %v483 = vld [vmem:[#allocation4 + $0x1d4] sm:$0xff]
    %v484 = vld [vmem:[#allocation4 + $0x1e8] sm:$0xff]
    %v485 = vld [vmem:[#allocation4 + $0x1fc] sm:$0xff]
    %v486 = vld [vmem:[#allocation4 + $0x210] sm:$0xff]
    %v487 = vld [vmem:[#allocation4 + $0x224] sm:$0xff]
    %v488 = vld [vmem:[#allocation4 + $0x238] sm:$0xff]
    %v489 = vld [vmem:[#allocation4 + $0x24c] sm:$0xff]
    %v490 = vld [vmem:[#allocation4 + $0x260] sm:$0xff]
    %v491 = vld [vmem:[#allocation4 + $0x274] sm:$0xff]
    %v492 = vld [vmem:[%s3 + $0x3] sm:$0x3]
    %v494 = vlaneseq
    %v495 = vshrl.u32 %v494, 7
    %v496 = vsub.s32 0, %v495
    %v497 = vrot.slane %v492, %v496
    %v498 = vlaneseq
    %v499 = vshrl.u32 %v498, 7
    %v500 = vsub.s32 1, %v499
    %v501 = vrot.slane %v492, %v500
    %v536 = vunpack.c.l.b16 %v460
    %v537 = vunpack.c.h.b16 %v460
    %v538 = vunpack.c.l.b16 %v461
    %v539 = vunpack.c.h.b16 %v461
    %v540 = vunpack.c.l.b16 %v462
    %v541 = vunpack.c.h.b16 %v462
    %v542 = vunpack.c.l.b16 %v463
    %v543 = vunpack.c.h.b16 %v463
    %v544 = vunpack.c.l.b16 %v464
    %v545 = vunpack.c.h.b16 %v464
    %v546 = vunpack.c.l.b16 %v465
    %v547 = vunpack.c.h.b16 %v465
    %v548 = vunpack.c.l.b16 %v466
    %v549 = vunpack.c.h.b16 %v466
    %v550 = vunpack.c.l.b16 %v467
    %v551 = vunpack.c.h.b16 %v467
    %v552 = vunpack.c.l.b16 %v468
    %v553 = vunpack.c.h.b16 %v468
    %v554 = vunpack.c.l.b16 %v469
    %v555 = vunpack.c.h.b16 %v469
    %v556 = vunpack.c.l.b16 %v470
    %v557 = vunpack.c.h.b16 %v470
    %v558 = vunpack.c.l.b16 %v471
    %v559 = vunpack.c.h.b16 %v471
    %v560 = vunpack.c.l.b16 %v472
    %v561 = vunpack.c.h.b16 %v472
    %v562 = vunpack.c.l.b16 %v473
    %v563 = vunpack.c.h.b16 %v473
    %v564 = vunpack.c.l.b16 %v474
    %v565 = vunpack.c.h.b16 %v474
    %v566 = vunpack.c.l.b16 %v475
    %v567 = vunpack.c.h.b16 %v475
    %v568 = vunpack.c.l.b16 %v476
    %v569 = vunpack.c.h.b16 %v476
    %v570 = vunpack.c.l.b16 %v477
    %v571 = vunpack.c.h.b16 %v477
    %v572 = vunpack.c.l.b16 %v478
    %v573 = vunpack.c.h.b16 %v478
    %v574 = vunpack.c.l.b16 %v479
    %v575 = vunpack.c.h.b16 %v479
    %v576 = vunpack.c.l.b16 %v480
    %v577 = vunpack.c.h.b16 %v480
    %v578 = vunpack.c.l.b16 %v481
    %v579 = vunpack.c.h.b16 %v481
    %v580 = vunpack.c.l.b16 %v482
    %v581 = vunpack.c.h.b16 %v482
    %v582 = vunpack.c.l.b16 %v483
    %v583 = vunpack.c.h.b16 %v483
    %v584 = vunpack.c.l.b16 %v484
    %v585 = vunpack.c.h.b16 %v484
    %v586 = vunpack.c.l.b16 %v485
    %v587 = vunpack.c.h.b16 %v485
    %v588 = vunpack.c.l.b16 %v486
    %v589 = vunpack.c.h.b16 %v486
    %v590 = vunpack.c.l.b16 %v487
    %v591 = vunpack.c.h.b16 %v487
    %v592 = vunpack.c.l.b16 %v488
    %v593 = vunpack.c.h.b16 %v488
    %v594 = vunpack.c.l.b16 %v489
    %v595 = vunpack.c.h.b16 %v489
    %v596 = vunpack.c.l.b16 %v490
    %v597 = vunpack.c.h.b16 %v490
    %v598 = vunpack.c.l.b16 %v491
    %v599 = vunpack.c.h.b16 %v491
    %v600 = vpack.c.b16 %v538, %v536
    %v601 = vpack.c.b16 %v539, %v537
    %v602 = vpack.c.b16 %v542, %v540
    %v603 = vpack.c.b16 %v543, %v541
    %v604 = vpack.c.b16 %v546, %v544
    %v605 = vpack.c.b16 %v547, %v545
    %v606 = vpack.c.b16 %v550, %v548
    %v607 = vpack.c.b16 %v551, %v549
    %v608 = vpack.c.b16 %v554, %v552
    %v609 = vpack.c.b16 %v555, %v553
    %v610 = vpack.c.b16 %v558, %v556
    %v611 = vpack.c.b16 %v559, %v557
    %v612 = vpack.c.b16 %v562, %v560
    %v613 = vpack.c.b16 %v563, %v561
    %v614 = vpack.c.b16 %v566, %v564
    %v615 = vpack.c.b16 %v567, %v565
    %v616 = vpack.c.b16 %v570, %v568
    %v617 = vpack.c.b16 %v571, %v569
    %v618 = vpack.c.b16 %v574, %v572
    %v619 = vpack.c.b16 %v575, %v573
    %v620 = vpack.c.b16 %v578, %v576
    %v621 = vpack.c.b16 %v579, %v577
    %v622 = vpack.c.b16 %v582, %v580
    %v623 = vpack.c.b16 %v583, %v581
    %v624 = vpack.c.b16 %v586, %v584
    %v625 = vpack.c.b16 %v587, %v585
    %v626 = vpack.c.b16 %v590, %v588
    %v627 = vpack.c.b16 %v591, %v589
    %v628 = vpack.c.b16 %v594, %v592
    %v629 = vpack.c.b16 %v595, %v593
    %v630 = vpack.c.b16 %v598, %v596
    %v631 = vpack.c.b16 %v599, %v597
    %664 = vmatprep.subr.bf16.mxu0 %v615
    %665 = vmatpush1.bf16.msra.mxu0 %v614
    %666 = vmatprep.subr.bf16.mxu0 %v613
    %667 = vmatpush1.bf16.msra.mxu0 %v612
    %668 = vmatprep.subr.bf16.mxu0 %v611
    %669 = vmatpush1.bf16.msra.mxu0 %v610
    %670 = vmatprep.subr.bf16.mxu0 %v609
    %671 = vmatpush1.bf16.msra.mxu0 %v608
    %672 = vmatprep.subr.bf16.mxu0 %v607
    %673 = vmatpush1.bf16.msra.mxu0 %v606
    %674 = vmatprep.subr.bf16.mxu0 %v605
    %675 = vmatpush1.bf16.msra.mxu0 %v604
    %676 = vmatprep.subr.bf16.mxu0 %v603
    %677 = vmatpush1.bf16.msra.mxu0 %v602
    %678 = vmatprep.subr.bf16.mxu0 %v601
    %679 = vmatpush1.bf16.msra.mxu0 %v600
    %680 = vmatprep.subr.bf16.mxu0 %v631
    %681 = vmatpush2.bf16.msra.mxu0 %v630
    %682 = vmatprep.subr.bf16.mxu0 %v629
    %683 = vmatpush2.bf16.msra.mxu0 %v628
    %684 = vmatprep.subr.bf16.mxu0 %v627
    %685 = vmatpush2.bf16.msra.mxu0 %v626
    %686 = vmatprep.subr.bf16.mxu0 %v625
    %687 = vmatpush2.bf16.msra.mxu0 %v624
    %688 = vmatprep.subr.bf16.mxu0 %v623
    %689 = vmatpush2.bf16.msra.mxu0 %v622
    %690 = vmatprep.subr.bf16.mxu0 %v621
    %691 = vmatpush2.bf16.msra.mxu0 %v620
    %692 = vmatprep.subr.bf16.mxu0 %v619
    %693 = vmatpush2.bf16.msra.mxu0 %v618
    %694 = vmatprep.subr.bf16.mxu0 %v617
    %695 = vmatpush2.bf16.msra.mxu0 %v616
    %696 = vmatprep.mubr.bf16.mxu0 %v459
    %697 = vmatmul.mubr.bf16.gmra.mxu0 %v458
    %v698 = vpop.f32.mrf.mxu0
    %v699 = vadd.f32 %v497, %v698
    %v700 = vpop.f32.mrf.mxu0
    %v701 = vadd.f32 %v501, %v700
    %v702 = vpop.f32.mrf.mxu0
    %v703 = vadd.f32 %v497, %v702
    %v704 = vpop.f32.mrf.mxu0
    %v705 = vadd.f32 %v501, %v704
    %706 = vdwg.mxu0
    %v707 = vmax.f32 %v699, 0.0
    %v708 = vmax.f32 %v701, 0.0
    %v709 = vmax.f32 %v703, 0.0
    %v710 = vmax.f32 %v705, 0.0
    %v711 = vpack.c.bf16 %v709, %v707
    %v712 = vpack.c.bf16 %v710, %v708
    %v713 = vld [vmem:[#allocation4 + $0x10] sm:$0xf]
    %v714 = vld [vmem:[#allocation4 + $0x24] sm:$0xf]
    %v715 = vld [vmem:[#allocation4 + $0x38] sm:$0xf]
    %v716 = vld [vmem:[#allocation4 + $0x4c] sm:$0xf]
    %v717 = vld [vmem:[#allocation4 + $0x60] sm:$0xf]
    %v718 = vld [vmem:[#allocation4 + $0x74] sm:$0xf]
    %v719 = vld [vmem:[#allocation4 + $0x88] sm:$0xf]
    %v720 = vld [vmem:[#allocation4 + $0x9c] sm:$0xf]
    %v721 = vld [vmem:[#allocation4 + $0xb0] sm:$0xf]
    %v722 = vld [vmem:[#allocation4 + $0xc4] sm:$0xf]
    %v723 = vld [vmem:[#allocation4 + $0xd8] sm:$0xf]
    %v724 = vld [vmem:[#allocation4 + $0xec] sm:$0xf]
    %v725 = vld [vmem:[#allocation4 + $0x100] sm:$0xf]
    %v726 = vld [vmem:[#allocation4 + $0x114] sm:$0xf]
    %v727 = vld [vmem:[#allocation4 + $0x128] sm:$0xf]
    %v728 = vld [vmem:[#allocation4 + $0x13c] sm:$0xf]
    %v729 = vld [vmem:[#allocation4 + $0x150] sm:$0xf]
    %v730 = vld [vmem:[#allocation4 + $0x164] sm:$0xf]
    %v731 = vld [vmem:[#allocation4 + $0x178] sm:$0xf]
    %v732 = vld [vmem:[#allocation4 + $0x18c] sm:$0xf]
    %v733 = vld [vmem:[#allocation4 + $0x1a0] sm:$0xf]
    %v734 = vld [vmem:[#allocation4 + $0x1b4] sm:$0xf]
    %v735 = vld [vmem:[#allocation4 + $0x1c8] sm:$0xf]
    %v736 = vld [vmem:[#allocation4 + $0x1dc] sm:$0xf]
    %v737 = vld [vmem:[#allocation4 + $0x1f0] sm:$0xf]
    %v738 = vld [vmem:[#allocation4 + $0x204] sm:$0xf]
    %v739 = vld [vmem:[#allocation4 + $0x218] sm:$0xf]
    %v740 = vld [vmem:[#allocation4 + $0x22c] sm:$0xf]
    %v741 = vld [vmem:[#allocation4 + $0x240] sm:$0xf]
    %v742 = vld [vmem:[#allocation4 + $0x254] sm:$0xf]
    %v743 = vld [vmem:[#allocation4 + $0x268] sm:$0xf]
    %v744 = vld [vmem:[#allocation4 + $0x27c] sm:$0xf]
    %v745 = vld [vmem:[%s3 + $0x5] sm:$0x1]
    %v747 = vlaneseq
    %v748 = vshrl.u32 %v747, 7
    %v749 = vsub.s32 0, %v748
    %v750 = vrot.slane %v745, %v749
    %v784 = vunpack.c.l.b16 %v713
    %v785 = vunpack.c.l.b16 %v714
    %v786 = vunpack.c.l.b16 %v715
    %v787 = vunpack.c.l.b16 %v716
    %v788 = vunpack.c.l.b16 %v717
    %v789 = vunpack.c.l.b16 %v718
    %v790 = vunpack.c.l.b16 %v719
    %v791 = vunpack.c.l.b16 %v720
    %v792 = vunpack.c.l.b16 %v721
    %v793 = vunpack.c.l.b16 %v722
    %v794 = vunpack.c.l.b16 %v723
    %v795 = vunpack.c.l.b16 %v724
    %v796 = vunpack.c.l.b16 %v725
    %v797 = vunpack.c.l.b16 %v726
    %v798 = vunpack.c.l.b16 %v727
    %v799 = vunpack.c.l.b16 %v728
    %v800 = vunpack.c.l.b16 %v729
    %v801 = vunpack.c.l.b16 %v730
    %v802 = vunpack.c.l.b16 %v731
    %v803 = vunpack.c.l.b16 %v732
    %v804 = vunpack.c.l.b16 %v733
    %v805 = vunpack.c.l.b16 %v734
    %v806 = vunpack.c.l.b16 %v735
    %v807 = vunpack.c.l.b16 %v736
    %v808 = vunpack.c.l.b16 %v737
    %v809 = vunpack.c.l.b16 %v738
    %v810 = vunpack.c.l.b16 %v739
    %v811 = vunpack.c.l.b16 %v740
    %v812 = vunpack.c.l.b16 %v741
    %v813 = vunpack.c.l.b16 %v742
    %v814 = vunpack.c.l.b16 %v743
    %v815 = vunpack.c.l.b16 %v744
    %v816 = vpack.c.b16 %v785, %v784
    %v817 = vpack.c.b16 %v787, %v786
    %v818 = vpack.c.b16 %v789, %v788
    %v819 = vpack.c.b16 %v791, %v790
    %v820 = vpack.c.b16 %v793, %v792
    %v821 = vpack.c.b16 %v795, %v794
    %v822 = vpack.c.b16 %v797, %v796
    %v823 = vpack.c.b16 %v799, %v798
    %v824 = vpack.c.b16 %v801, %v800
    %v825 = vpack.c.b16 %v803, %v802
    %v826 = vpack.c.b16 %v805, %v804
    %v827 = vpack.c.b16 %v807, %v806
    %v828 = vpack.c.b16 %v809, %v808
    %v829 = vpack.c.b16 %v811, %v810
    %v830 = vpack.c.b16 %v813, %v812
    %v831 = vpack.c.b16 %v815, %v814
    %848 = vmatprep.subr.bf16.mxu0 0
    %849 = vmatpush1.bf16.msra.mxu0 %v823
    %850 = vmatprep.subr.bf16.mxu0 0
    %851 = vmatpush1.bf16.msra.mxu0 %v822
    %852 = vmatprep.subr.bf16.mxu0 0
    %853 = vmatpush1.bf16.msra.mxu0 %v821
    %854 = vmatprep.subr.bf16.mxu0 0
    %855 = vmatpush1.bf16.msra.mxu0 %v820
    %856 = vmatprep.subr.bf16.mxu0 0
    %857 = vmatpush1.bf16.msra.mxu0 %v819
    %858 = vmatprep.subr.bf16.mxu0 0
    %859 = vmatpush1.bf16.msra.mxu0 %v818
    %860 = vmatprep.subr.bf16.mxu0 0
    %861 = vmatpush1.bf16.msra.mxu0 %v817
    %862 = vmatprep.subr.bf16.mxu0 0
    %863 = vmatpush1.bf16.msra.mxu0 %v816
    %864 = vmatprep.subr.bf16.mxu0 0
    %865 = vmatpush2.bf16.msra.mxu0 %v831
    %866 = vmatprep.subr.bf16.mxu0 0
    %867 = vmatpush2.bf16.msra.mxu0 %v830
    %868 = vmatprep.subr.bf16.mxu0 0
    %869 = vmatpush2.bf16.msra.mxu0 %v829
    %870 = vmatprep.subr.bf16.mxu0 0
    %871 = vmatpush2.bf16.msra.mxu0 %v828
    %872 = vmatprep.subr.bf16.mxu0 0
    %873 = vmatpush2.bf16.msra.mxu0 %v827
    %874 = vmatprep.subr.bf16.mxu0 0
    %875 = vmatpush2.bf16.msra.mxu0 %v826
    %876 = vmatprep.subr.bf16.mxu0 0
    %877 = vmatpush2.bf16.msra.mxu0 %v825
    %878 = vmatprep.subr.bf16.mxu0 0
    %879 = vmatpush2.bf16.msra.mxu0 %v824
    %880 = vmatprep.mubr.bf16.mxu0 %v712
    %881 = vmatmul.mubr.bf16.gmra.mxu0 %v711
    %v882 = vpop.f32.mrf.mxu0
    %v883 = vadd.f32 %v750, %v882
    %v884 = vpop.f32.mrf.mxu0
    %v885 = vpop.f32.mrf.mxu0
    %v886 = vadd.f32 %v750, %v885
    %v887 = vpop.f32.mrf.mxu0
    %888 = vdwg.mxu0
    %889 = vmax.xlane.f32.xlu0 %v883
    %v890 = vpop.xlane.xlu0 %889
    %891 = vmax.xlane.f32.xlu0 %v886
    %v892 = vpop.xlane.xlu0 %891
    %v893 = vsub.f32 %v883, %v890
    %v894 = vsub.f32 %v886, %v892
    %v895 = vmul.f32 %v893, 1.442695
    %v896 = vpow.pop %v895
    %v897 = vmul.f32 %v894, 1.442695
    %v898 = vpow.pop %v897
    %899 = vadd.xlane.f32.xlu0 %v896
    %v900 = vpop.xlane.xlu0 %899
    %901 = vadd.xlane.f32.xlu0 %v898
    %v902 = vpop.xlane.xlu0 %901
    %v903 = vrcp.pop %v900
    %v904 = vrcp.pop %v902
    %v905 = vmul.f32 %v896, %v903
    %v906 = vmul.f32 %v898, %v904
    %v907 = vpack.c.bf16 %v906, %v905
    %v909 = vunpack.c.l.b16 %v907
    %v910 = vunpack.c.h.b16 %v907
    %v911 = vpack.c.b16 %v909, %v909
    %v912 = vpack.c.b16 %v910, %v910
    %915 = vst [vmem:[%s4] sm:$0xf] %v911
    %916 = vst [vmem:[%s4 + $0x4] sm:$0xf] %v912
    // Predicated region
    $region26: #{forward.1} parent=1 // pred_check
      _
    $region27: #{forward.1} parent=1 // pred_check_branch
      %918 = sbr.rel (0) target = $region29
    $region28: #{forward.1} parent=1 // pred_region
      _
    $region29: #{forward.1} parent=1 // pred_fallthru
      _
    // Predicated region
    $region30: #{forward.1} parent=1 // pred_check
      _
    $region31: #{forward.1} parent=1 // pred_check_branch
      %920 = sbr.rel (0) target = $region33
    $region32: #{forward.1} parent=1 // pred_region
      _
    $region33: #{forward.1} parent=1 // pred_fallthru
      _
    %921 = vsyncpa [#allocation3], 1
    %922 = vsyncpa [#allocation5], 1

</llo_original>
